<compile_context>
chip_gen: v5e
topology: v5e:2x2
jax: 0.10.0
libtpu: 0.0.40
codegen_flags: <defaults>
</compile_context>

<pallas_src>
import functools

import jax
import jax.numpy as jnp
from jax import lax
from jax.experimental import pallas as pl
from jax.experimental.pallas import tpu as pltpu


def _max_cosine_kernel(x_ref, sn_ref, o_ref, *, window_size, num_windows):
    # x_ref : (NB, C, L)   raw time-series block for this grid step
    # sn_ref: (C*S, Kp)    pre-normalized shapelets, 1/C folded in (resident)
    # o_ref : (1, NB, Kp)  per-sample max cosine similarity
    x = x_ref[...]                       # (NB, C, L) f32
    sn = sn_ref[...]                     # (C*S, Kp)  f32
    nb, c, _ = x.shape
    s = window_size
    w = num_windows

    # In-kernel unfold: W static slices along the lane (time) axis.
    xu = jnp.stack([x[:, :, i:i + s] for i in range(w)], axis=1)  # (NB, W, C, S)

    # L2-normalize each window along S (EUP rsqrt; matches clamp(min=1e-8)).
    ss = jnp.sum(xu * xu, axis=-1, keepdims=True)                 # (NB, W, C, 1)
    xn = xu * lax.rsqrt(jnp.maximum(ss, 1e-16))

    # One fused matmul: contraction over C*S does the per-channel dot products
    # AND the channel sum (1/C already folded into sn).
    rows = xn.reshape(nb * w, c * s)                              # (NB*W, C*S)
    sim = jnp.dot(rows, sn, preferred_element_type=jnp.float32)   # (NB*W, Kp)

    # ReLU + global max-pool over windows; lane-dense (NB, Kp) store.
    sim = jnp.maximum(sim, 0.0).reshape(nb, w, -1)
    o_ref[0] = jnp.max(sim, axis=1)                               # (NB, Kp)


def _pick_batch_block(n, target=8):
    """Largest divisor of n that is <= target while keeping >= 2 grid steps
    (so both v7x TensorCores get work).  Falls back to 1 sample per step."""
    best = 1
    for d in range(1, min(n, target) + 1):
        if n % d == 0 and n // d >= 2:
            best = d
    return best


def max_cosine_similarity_block(x, shapelets, *, batch_block=None):
    """x: (N, C, L) float32; shapelets: (C, K, S) float32 -> (N, 1, K)."""
    N, C, L = x.shape
    Cs, K, S = shapelets.shape
    assert Cs == C
    W = L - S + 1

    # Hoisted parameter preprocessing (depends only on the shapelets):
    # normalize along S, fold in the 1/in_channels scale, lay out as a
    # (C*S, Kp) matmul RHS with the lane dim padded to a multiple of 128.
    Kp = ((K + 127) // 128) * 128
    s_norm = jnp.sqrt(jnp.sum(shapelets * shapelets, axis=2, keepdims=True))
    sn = shapelets / jnp.maximum(s_norm, 1e-8) / float(C)         # (C, K, S)
    sn = jnp.transpose(sn, (0, 2, 1)).reshape(C * S, K)           # (C*S, K)
    sn = jnp.pad(sn, ((0, 0), (0, Kp - K)))                       # (C*S, Kp)

    NB = batch_block if batch_block is not None else _pick_batch_block(N)
    assert N % NB == 0
    Ng = N // NB

    kernel = functools.partial(
        _max_cosine_kernel, window_size=S, num_windows=W)

    cost = pl.CostEstimate(
        flops=2 * N * W * Kp * C * S,
        transcendentals=N * C * W,
        bytes_accessed=N * C * L * 4 + C * S * Kp * 4 + N * Kp * 4,
    )

    out = pl.pallas_call(
        kernel,
        out_shape=jax.ShapeDtypeStruct((Ng, NB, Kp), jnp.float32),
        grid_spec=pltpu.PrefetchScalarGridSpec(
            num_scalar_prefetch=0,
            grid=(Ng,),
            in_specs=[
                pl.BlockSpec((NB, C, L), lambda n: (n, 0, 0)),
                pl.BlockSpec((C * S, Kp), lambda n: (0, 0)),
            ],
            out_specs=pl.BlockSpec((1, NB, Kp), lambda n: (n, 0, 0)),
        ),
        compiler_params=pltpu.CompilerParams(
            dimension_semantics=("parallel",),
            vmem_limit_bytes=32 * 1024 * 1024,
        ),
        cost_estimate=cost,
    )(x, sn)

    # (Ng, NB, Kp) -> (N, 1, K)
    return out.reshape(N, Kp)[:, None, :K]


def _reference(x, shapelets):
    # Pure-JAX reference mirroring the PyTorch forward.
    N, C, L = x.shape
    _, K, S = shapelets.shape
    W = L - S + 1
    idx = jnp.arange(W)[:, None] + jnp.arange(S)[None, :]
    xu = x[:, :, idx]                                            # (N,C,W,S)
    xu = xu / jnp.maximum(
        jnp.linalg.norm(xu, axis=3, keepdims=True), 1e-8)
    sn = shapelets / jnp.maximum(
        jnp.linalg.norm(shapelets, axis=2, keepdims=True), 1e-8)
    sim = jnp.matmul(xu, jnp.swapaxes(sn, 1, 2))                 # (N,C,W,K)
    sim = jnp.sum(sim, axis=1, keepdims=True)                    # (N,1,W,K)
    sim = jnp.swapaxes(sim, 2, 3) / C                            # (N,1,K,W)
    sim = jnp.maximum(sim, 0.0)
    return jnp.max(sim, axis=3)                                  # (N,1,K)


if __name__ == "__main__":
    key = jax.random.PRNGKey(0)
    k_x, k_s = jax.random.split(key)

    # Small shapes consistent with the module's forward:
    #   batch N=2, in_channels C=4, series length L=16,
    #   shapelets_size S=8, num_shapelets K=32
    N, C, L = 2, 4, 16
    S, K = 8, 32

    x = jax.random.normal(k_x, (N, C, L), dtype=jnp.float32)
    # Deterministic "torch.randn"-style parameter init.
    shapelets = jax.random.normal(k_s, (C, K, S), dtype=jnp.float32)

    out = jax.block_until_ready(max_cosine_similarity_block(x, shapelets))
    ref = jax.block_until_ready(_reference(x, shapelets))

    assert out.shape == (N, 1, K)
    assert jnp.allclose(out, ref, atol=1e-5, rtol=1e-5)

    print("KERNEL_OK")
</pallas_src>

<mosaic_0001>
module attributes {stable_mosaic.version = 11 : i64} {
  func.func @_max_cosine_kernel(%arg0: i32, %arg1: memref<1x4x16xf32, #tpu.memory_space<vmem>>, %arg2: memref<32x128xf32, #tpu.memory_space<vmem>>, %arg3: memref<1x1x128xf32, #tpu.memory_space<vmem>>) attributes {dimension_semantics = [#tpu.dimension_semantics<parallel>], iteration_bounds = array<i64: 2>, scalar_prefetch = 0 : i64, scratch_operands = 0 : i64, tpu.core_type = #tpu.core_type<tc>, window_params = [{transform_indices = @transform_0, window_bounds = array<i64: 1, 4, 16>}, {pipeline_mode = #tpu.pipeline_mode<synchronous>, transform_indices = @transform_1, window_bounds = array<i64: 32, 128>}, {transform_indices = @transform_2, window_bounds = array<i64: 1, 1, 128>}]} {
    %c0 = arith.constant 0 : index
    %c0_0 = arith.constant 0 : index
    %c0_1 = arith.constant 0 : index
    %0 = vector.load %arg1[%c0, %c0_0, %c0_1] : memref<1x4x16xf32, #tpu.memory_space<vmem>>, vector<1x4x16xf32>
    %c0_2 = arith.constant 0 : index
    %c0_3 = arith.constant 0 : index
    %1 = vector.load %arg2[%c0_2, %c0_3] : memref<32x128xf32, #tpu.memory_space<vmem>>, vector<32x128xf32>
    %2 = vector.extract_strided_slice %0 {offsets = [0, 0, 0], sizes = [1, 4, 8], strides = [1, 1, 1]} : vector<1x4x16xf32> to vector<1x4x8xf32>
    %3 = vector.extract_strided_slice %0 {offsets = [0, 0, 1], sizes = [1, 4, 8], strides = [1, 1, 1]} : vector<1x4x16xf32> to vector<1x4x8xf32>
    %4 = vector.extract_strided_slice %0 {offsets = [0, 0, 2], sizes = [1, 4, 8], strides = [1, 1, 1]} : vector<1x4x16xf32> to vector<1x4x8xf32>
    %5 = vector.extract_strided_slice %0 {offsets = [0, 0, 3], sizes = [1, 4, 8], strides = [1, 1, 1]} : vector<1x4x16xf32> to vector<1x4x8xf32>
    %6 = vector.extract_strided_slice %0 {offsets = [0, 0, 4], sizes = [1, 4, 8], strides = [1, 1, 1]} : vector<1x4x16xf32> to vector<1x4x8xf32>
    %7 = vector.extract_strided_slice %0 {offsets = [0, 0, 5], sizes = [1, 4, 8], strides = [1, 1, 1]} : vector<1x4x16xf32> to vector<1x4x8xf32>
    %8 = vector.extract_strided_slice %0 {offsets = [0, 0, 6], sizes = [1, 4, 8], strides = [1, 1, 1]} : vector<1x4x16xf32> to vector<1x4x8xf32>
    %9 = vector.extract_strided_slice %0 {offsets = [0, 0, 7], sizes = [1, 4, 8], strides = [1, 1, 1]} : vector<1x4x16xf32> to vector<1x4x8xf32>
    %10 = vector.extract_strided_slice %0 {offsets = [0, 0, 8], sizes = [1, 4, 8], strides = [1, 1, 1]} : vector<1x4x16xf32> to vector<1x4x8xf32>
    %11 = vector.shape_cast %2 : vector<1x4x8xf32> to vector<1x1x4x8xf32>
    %12 = vector.shape_cast %3 : vector<1x4x8xf32> to vector<1x1x4x8xf32>
    %13 = vector.shape_cast %4 : vector<1x4x8xf32> to vector<1x1x4x8xf32>
    %14 = vector.shape_cast %5 : vector<1x4x8xf32> to vector<1x1x4x8xf32>
    %15 = vector.shape_cast %6 : vector<1x4x8xf32> to vector<1x1x4x8xf32>
    %16 = vector.shape_cast %7 : vector<1x4x8xf32> to vector<1x1x4x8xf32>
    %17 = vector.shape_cast %8 : vector<1x4x8xf32> to vector<1x1x4x8xf32>
    %18 = vector.shape_cast %9 : vector<1x4x8xf32> to vector<1x1x4x8xf32>
    %19 = vector.shape_cast %10 : vector<1x4x8xf32> to vector<1x1x4x8xf32>
    %20 = tpu.concatenate %11, %12, %13, %14, %15, %16, %17, %18, %19 in 1 : vector<1x1x4x8xf32>, vector<1x1x4x8xf32>, vector<1x1x4x8xf32>, vector<1x1x4x8xf32>, vector<1x1x4x8xf32>, vector<1x1x4x8xf32>, vector<1x1x4x8xf32>, vector<1x1x4x8xf32>, vector<1x1x4x8xf32> -> vector<1x9x4x8xf32>
    %21 = arith.mulf %20, %20 : vector<1x9x4x8xf32>
    %cst = arith.constant dense<0.000000e+00> : vector<1x9x4xf32>
    %22 = vector.multi_reduction <add>, %21, %cst [3] : vector<1x9x4x8xf32> to vector<1x9x4xf32>
    %23 = vector.shape_cast %22 : vector<1x9x4xf32> to vector<1x9x4x1xf32>
    %cst_4 = arith.constant 1.000000e-16 : f32
    %24 = vector.broadcast %cst_4 : f32 to vector<1x9x4x1xf32>
    %25 = arith.maximumf %23, %24 : vector<1x9x4x1xf32>
    %26 = math.rsqrt %25 : vector<1x9x4x1xf32>
    %27 = vector.broadcast %26 : vector<1x9x4x1xf32> to vector<1x9x4x8xf32>
    %28 = arith.mulf %20, %27 : vector<1x9x4x8xf32>
    %29 = vector.shape_cast %28 : vector<1x9x4x8xf32> to vector<9x32xf32>
    %cst_5 = arith.constant dense<0.000000e+00> : vector<9x128xf32>
    %30 = tpu.matmul %29, %1, %cst_5 {dimension_numbers = #tpu.dot_dimension_numbers<[1], [0], [0], [1], [0, 0, 1, 1], [], []>} : vector<9x32xf32>, vector<32x128xf32>, vector<9x128xf32> -> vector<9x128xf32>
    %cst_6 = arith.constant 0.000000e+00 : f32
    %31 = vector.broadcast %cst_6 : f32 to vector<9x128xf32>
    %32 = arith.maximumf %30, %31 : vector<9x128xf32>
    %33 = vector.shape_cast %32 : vector<9x128xf32> to vector<1x9x128xf32>
    %cst_7 = arith.constant dense<0xFF800000> : vector<1x128xf32>
    %34 = vector.multi_reduction <maximumf>, %33, %cst_7 [1] : vector<1x9x128xf32> to vector<1x128xf32>
    %c0_8 = arith.constant 0 : index
    %c0_9 = arith.constant 0 : index
    %c0_10 = arith.constant 0 : index
    %35 = vector.load %arg3[%c0_8, %c0_9, %c0_10] : memref<1x1x128xf32, #tpu.memory_space<vmem>>, vector<1x1x128xf32>
    %36 = vector.shape_cast %35 : vector<1x1x128xf32> to vector<1x128xf32>
    %37 = vector.shape_cast %34 : vector<1x128xf32> to vector<1x1x128xf32>
    tpu.vector_store %arg3[%c0_8, %c0_9, %c0_10], %37 {strides = array<i32>} : memref<1x1x128xf32, #tpu.memory_space<vmem>>, vector<1x1x128xf32>,
    return
  }
  func.func @transform_0(%arg0: i32) -> (i32, i32, i32) {
    %c0_i32 = arith.constant 0 : i32
    %c0_i32_0 = arith.constant 0 : i32
    %c0_i32_1 = arith.constant 0 : i32
    return %arg0, %c0_i32, %c0_i32_0 : i32, i32, i32
  }
  func.func @transform_1(%arg0: i32) -> (i32, i32) {
    %c0_i32 = arith.constant 0 : i32
    %c0_i32_0 = arith.constant 0 : i32
    %c0_i32_1 = arith.constant 0 : i32
    return %c0_i32, %c0_i32_0 : i32, i32
  }
  func.func @transform_2(%arg0: i32) -> (i32, i32, i32) {
    %c0_i32 = arith.constant 0 : i32
    %c0_i32_0 = arith.constant 0 : i32
    %c0_i32_1 = arith.constant 0 : i32
    return %arg0, %c0_i32, %c0_i32_0 : i32, i32, i32
  }
}

</mosaic_0001>

<llo_original>
// kernel: tpu_custom_call.1
$region0: #{tpu_custom_call.1}
  #allocation0 [shape = 'u32[]', space=smem, size = 0x4, offset = 0x4, fixed_abs, tag = 'smem constant byte address 0x4 - core index']
  #allocation1 [shape = 'u32[72,128]{1,0:T(1,128)}', space=vmem, size = 0x9000, scoped, tag = 'internal scratch']
  %s0 = inlined_call_operand.hbm [shape: f32[2,4,16], index: 0, kind: input, shape index: {}]
  %s1 = inlined_call_operand.hbm [shape: f32[32,128], index: 1, kind: input, shape index: {}]
  %s2 = inlined_call_operand.hbm [shape: f32[2,1,128], index: 2, kind: output, shape index: {}]
  %s3 = sld [smem:[#allocation0]]
  $region49: #{tpu_custom_call.1} parent=0
    _
  %s5 = ssub.s32 1, %s3
  %s6 = scalar_select 0, %s5, %s3
  $region1: #{tpu_custom_call.1} parent=0
    #allocation2 [shape = 'u8[4096]{0}', space=vmem, size = 0x1000, scoped, tag = 'input window, operand 0']
    #allocation3 [shape = 's32[2]{0}', space=sflag, size = 0x8, scoped, tag = 'scoped memory for tpu_custom_call.1']
    #allocation4 [shape = 's32[2]{0}', space=sflag, size = 0x8, scoped, tag = 'scoped memory for tpu_custom_call.1']
    #allocation5 [shape = 'u8[16384]{0}', space=vmem, size = 0x4000, scoped, tag = 'input window, operand 1, single buffered']
    #allocation6 [shape = 's32[1]{0}', space=sflag, size = 0x4, scoped, tag = 'scoped memory for tpu_custom_call.1']
    #allocation7 [shape = 'u8[1024]{0}', space=vmem, size = 0x400, scoped, tag = 'output window, operand 0']
    %7 = vsyncpa [#allocation3], 0
    %s8 = scalar_lea.sflag [#allocation3], 1
    %9 = vsyncpa %s8, 0
    %10 = vsyncpa [#allocation6], 0
    %11 = vsyncpa [#allocation4], 0
    %s12 = scalar_lea.sflag [#allocation4], 1
    %13 = vsyncpa %s12, 0
    loop: start=0, step=1, limit=4
    $region2: #{tpu_custom_call.1} parent=1 // loop_pre_header
      _
    $region3: #{tpu_custom_call.1} parent=1 // loop_header
      %s15 = sphi 0, %s19
      %p16 = scmp.ge.s32.totalorder %s15, 4
      %s25 = sphi 0, %s27
      %s28 = sphi 0, %s25
      %s29 = sphi 0, %s28
      %s45 = sphi 0, %s29
      %s49 = sphi 0, %s49
      %s51 = sphi 0, %s49
      %s52 = sphi 0, %s51
      %s66 = sphi 0, %s52
      %s72 = sphi 0, %s74
      %s75 = sphi 0, %s72
      %s76 = sphi 0, %s75
      %s92 = sphi 0, %s76
    $region4: #{tpu_custom_call.1} parent=1 // loop_header_branch
      %18 = sbr.rel (%p16) target = $region8
    $region5: #{tpu_custom_call.1} parent=1 // loop_body
      %s20 = ssub.s32 %s15, 1
      %s21 = ssub.s32 %s15, 2
      %s22 = sadd.s32 %s15, 1
      %s23 = ssub.s32 %s15, %s22
      %p24 = scmp.eq.s32.totalorder %s23, 0
      %s26 = sadd.s32 %s25, 1
      %s27 = scalar_select %p24, %s25, %s26
      %p30 = pneg %p24
      %p31 = scmp.eq.s32.totalorder %s15, 1
      %p32 = por %p30, %p31
      %p33 = scmp.ne.s32.totalorder %s25, %s28
      %p34 = scmp.eq.s32.totalorder %s15, 0
      %p35 = por %p33, %p34
      %p36 = scmp.ne.s32.totalorder %s25, %s28
      %p37 = scmp.eq.s32.totalorder %s20, 1
      %p38 = por %p36, %p37
      %p39 = scmp.ne.s32.totalorder %s28, %s29
      %p40 = scmp.eq.s32.totalorder %s20, 0
      %p41 = por %p39, %p40
      %p42 = scmp.ne.s32.totalorder %s28, %s29
      %p43 = scmp.eq.s32.totalorder %s21, 1
      %p44 = por %p42, %p43
      %p46 = scmp.ne.s32.totalorder %s29, %s45
      %p47 = scmp.eq.s32.totalorder %s21, 0
      %p48 = por %p46, %p47
      %s50 = sadd.s32 %s49, 1
      %p53 = scmp.eq.s32.totalorder %s15, 1
      %p54 = scmp.ne.s32.totalorder %s49, %s51
      %p55 = scmp.eq.s32.totalorder %s15, 0
      %p56 = por %p54, %p55
      %p57 = scmp.ne.s32.totalorder %s49, %s51
      %p58 = scmp.eq.s32.totalorder %s20, 1
      %p59 = por %p57, %p58
      %p60 = scmp.ne.s32.totalorder %s51, %s52
      %p61 = scmp.eq.s32.totalorder %s20, 0
      %p62 = por %p60, %p61
      %p63 = scmp.ne.s32.totalorder %s51, %s52
      %p64 = scmp.eq.s32.totalorder %s21, 1
      %p65 = por %p63, %p64
      %p67 = scmp.ne.s32.totalorder %s52, %s66
      %p68 = scmp.eq.s32.totalorder %s21, 0
      %p69 = por %p67, %p68
      %s70 = ssub.s32 %s15, %s22
      %p71 = scmp.eq.s32.totalorder %s70, 0
      %s73 = sadd.s32 %s72, 1
      %s74 = scalar_select %p71, %s72, %s73
      %p77 = pneg %p71
      %p78 = scmp.eq.s32.totalorder %s15, 1
      %p79 = por %p77, %p78
      %p80 = scmp.ne.s32.totalorder %s72, %s75
      %p81 = scmp.eq.s32.totalorder %s15, 0
      %p82 = por %p80, %p81
      %p83 = scmp.ne.s32.totalorder %s72, %s75
      %p84 = scmp.eq.s32.totalorder %s20, 1
      %p85 = por %p83, %p84
      %p86 = scmp.ne.s32.totalorder %s75, %s76
      %p87 = scmp.eq.s32.totalorder %s20, 0
      %p88 = por %p86, %p87
      %p89 = scmp.ne.s32.totalorder %s75, %s76
      %p90 = scmp.eq.s32.totalorder %s21, 1
      %p91 = por %p89, %p90
      %p93 = scmp.ne.s32.totalorder %s76, %s92
      %p94 = scmp.eq.s32.totalorder %s21, 0
      %p95 = por %p93, %p94
      %p96 = scmp.le.s32.totalorder 1, %s15
      %p97 = scmp.lt.s32.totalorder %s15, 3
      %p98 = pnand %p96, %p97
      %p99 = pneg %p98
      // Predicated region
      $region9: #{tpu_custom_call.1} parent=5 // pred_check
        _
      $region10: #{tpu_custom_call.1} parent=5 // pred_check_branch
        %101 = sbr.rel (%p98) target = $region12
      $region11: #{tpu_custom_call.1} parent=5 // pred_region
        %s102 = ssub.s32 %s15, 1
        // Predicated region
        $region13: #{tpu_custom_call.1} parent=11 // pred_check
          %p103 = pneg %p62
        $region14: #{tpu_custom_call.1} parent=11 // pred_check_branch
          %105 = sbr.rel (%p103) target = $region16
        $region15: #{tpu_custom_call.1} parent=11 // pred_region
          %107 = vsyncadd [#allocation6], 0
          %s108 = sshll.u32 %s1, 4
          %s109 = int_to_ptr.hbm [resolvable:$true] %s108
          %s110 = sshll.u32 [#allocation5], 4
          %s111 = int_to_ptr.vmem [resolvable:$true] %s110
          %116 = dma.hbm_to_vmem [thread:$0]  %s109, 512, %s111, [#allocation6], 128, 128, 8
        $region16: #{tpu_custom_call.1} parent=11 // pred_fallthru
          _
      $region12: #{tpu_custom_call.1} parent=5 // pred_fallthru
        _
      %p117 = scmp.lt.s32.totalorder %s15, 2
      // Predicated region
      $region17: #{tpu_custom_call.1} parent=5 // pred_check
        %p118 = pneg %p117
      $region18: #{tpu_custom_call.1} parent=5 // pred_check_branch
        %120 = sbr.rel (%p118) target = $region20
      $region19: #{tpu_custom_call.1} parent=5 // pred_region
        // Predicated region
        $region21: #{tpu_custom_call.1} parent=19 // pred_check
          %p121 = pneg %p35
        $region22: #{tpu_custom_call.1} parent=19 // pred_check_branch
          %123 = sbr.rel (%p121) target = $region24
        $region23: #{tpu_custom_call.1} parent=19 // pred_region
          %s124 = sand.u32 %s25, 1
          %s125 = scalar_lea.sflag [#allocation3], %s124
          %s126 = sand.u32 %s25, 1
          %s127 = smul.addr %s126, 4
          %s128 = scalar_lea.vmem [#allocation2], %s127
          %130 = vsyncadd %s125, 0
          %s131 = smul.addr %s15, 4
          %s132 = scalar_lea.hbm %s0, %s131
          %s134 = sshll.u32 %s132, 4
          %s135 = int_to_ptr.hbm [resolvable:$true] %s134
          %s136 = sshll.u32 %s128, 4
          %s137 = int_to_ptr.vmem [resolvable:$true] %s136
          %139 = dma.hbm_to_vmem [thread:$0]  %s135, 64, %s137, %s125
        $region24: #{tpu_custom_call.1} parent=19 // pred_fallthru
          _
      $region20: #{tpu_custom_call.1} parent=5 // pred_fallthru
        _
      %p140 = scmp.le.s32.totalorder 1, %s15
      %p141 = scmp.lt.s32.totalorder %s15, 3
      %p142 = pnand %p140, %p141
      %p143 = pneg %p142
      // Predicated region
      $region25: #{tpu_custom_call.1} parent=5 // pred_check
        _
      $region26: #{tpu_custom_call.1} parent=5 // pred_check_branch
        %145 = sbr.rel (%p142) target = $region28
      $region27: #{tpu_custom_call.1} parent=5 // pred_region
        %s146 = ssub.s32 %s15, 1
        %s147 = sand.u32 %s28, 1
        %s148 = scalar_lea.sflag [#allocation3], %s147
        %s149 = sand.u32 %s28, 1
        %s150 = smul.addr %s149, 4
        %s151 = scalar_lea.vmem [#allocation2], %s150
        // Predicated region
        $region29: #{tpu_custom_call.1} parent=27 // pred_check
          %p152 = pneg %p41
        $region30: #{tpu_custom_call.1} parent=27 // pred_check_branch
          %154 = sbr.rel (%p152) target = $region32
        $region31: #{tpu_custom_call.1} parent=27 // pred_region
          %156 = dma.done %s148, 64
        $region32: #{tpu_custom_call.1} parent=27 // pred_fallthru
          _
        // Predicated region
        $region33: #{tpu_custom_call.1} parent=27 // pred_check
          %p157 = pneg %p62
        $region34: #{tpu_custom_call.1} parent=27 // pred_check_branch
          %159 = sbr.rel (%p157) target = $region36
        $region35: #{tpu_custom_call.1} parent=27 // pred_region
          %161 = dma.done [#allocation6], 512
        $region36: #{tpu_custom_call.1} parent=27 // pred_fallthru
          _
        %s162 = sand.u32 %s28, 1
        %s163 = scalar_lea.sflag [#allocation3], %s162
        %s164 = sand.u32 %s28, 1
        %s165 = smul.addr %s164, 4
        %s166 = scalar_lea.vmem [#allocation2], %s165
        %p167 = pneg %p41
        %p168 = pneg %p38
        %p169 = pneg %p62
        %p170 = pneg %p59
        %p171 = pneg %p88
        %p172 = pneg %p85
        %s173 = sand.u32 %s75, 1
        %s174 = scalar_lea.sflag [#allocation4], %s173
        %s175 = sand.u32 %s75, 1
        %s176 = scalar_lea.vmem [#allocation7], %s175
        %v177 = vld [vmem:[%s151] sm:$0xf]
        %v178 = vld [vmem:[#allocation5] sm:$0xff]
        %v179 = vld [vmem:[#allocation5 + $0x8] sm:$0xff]
        %v180 = vld [vmem:[#allocation5 + $0x10] sm:$0xff]
        %v181 = vld [vmem:[#allocation5 + $0x18] sm:$0xff]
        %183 = vrot.lane.b32.xlu0 %v177, 127
        %v184 = vpop.permute.xlu0 %183
        %186 = vrot.lane.b32.xlu0 %v177, 126
        %v187 = vpop.permute.xlu0 %186
        %189 = vrot.lane.b32.xlu0 %v177, 125
        %v190 = vpop.permute.xlu0 %189
        %192 = vrot.lane.b32.xlu0 %v177, 124
        %v193 = vpop.permute.xlu0 %192
        %195 = vrot.lane.b32.xlu0 %v177, 123
        %v196 = vpop.permute.xlu0 %195
        %198 = vrot.lane.b32.xlu0 %v177, 122
        %v199 = vpop.permute.xlu0 %198
        %201 = vrot.lane.b32.xlu0 %v177, 121
        %v202 = vpop.permute.xlu0 %201
        %204 = vrot.lane.b32.xlu0 %v177, 120
        %v205 = vpop.permute.xlu0 %204
        %v207 = vmul.f32 %v177, %v177
        %v208 = vmul.f32 %v184, %v184
        %v209 = vmul.f32 %v187, %v187
        %v210 = vmul.f32 %v190, %v190
        %v211 = vmul.f32 %v193, %v193
        %v212 = vmul.f32 %v196, %v196
        %v213 = vmul.f32 %v199, %v199
        %v214 = vmul.f32 %v202, %v202
        %v215 = vmul.f32 %v205, %v205
        %vm216 = vcmask 60416
        %v217 = vsel %vm216, %v207, 0.0
        %218 = vadd.xlane.f32.xlu0 %v217
        %v219 = vpop.xlane.xlu0 %218
        %v220 = vsel %vm216, %v208, 0.0
        %221 = vadd.xlane.f32.xlu0 %v220
        %v222 = vpop.xlane.xlu0 %221
        %v223 = vsel %vm216, %v209, 0.0
        %224 = vadd.xlane.f32.xlu0 %v223
        %v225 = vpop.xlane.xlu0 %224
        %v226 = vsel %vm216, %v210, 0.0
        %227 = vadd.xlane.f32.xlu0 %v226
        %v228 = vpop.xlane.xlu0 %227
        %v229 = vsel %vm216, %v211, 0.0
        %230 = vadd.xlane.f32.xlu0 %v229
        %v231 = vpop.xlane.xlu0 %230
        %v232 = vsel %vm216, %v212, 0.0
        %233 = vadd.xlane.f32.xlu0 %v232
        %v234 = vpop.xlane.xlu0 %233
        %v235 = vsel %vm216, %v213, 0.0
        %236 = vadd.xlane.f32.xlu0 %v235
        %v237 = vpop.xlane.xlu0 %236
        %v238 = vsel %vm216, %v214, 0.0
        %239 = vadd.xlane.f32.xlu0 %v238
        %v240 = vpop.xlane.xlu0 %239
        %v241 = vsel %vm216, %v215, 0.0
        %242 = vadd.xlane.f32.xlu0 %v241
        %v243 = vpop.xlane.xlu0 %242
        %v244 = vmax.f32 %v219, 1e-16
        %v245 = vmax.f32 %v222, 1e-16
        %v246 = vmax.f32 %v225, 1e-16
        %v247 = vmax.f32 %v228, 1e-16
        %v248 = vmax.f32 %v231, 1e-16
        %v249 = vmax.f32 %v234, 1e-16
        %v250 = vmax.f32 %v237, 1e-16
        %v251 = vmax.f32 %v240, 1e-16
        %v252 = vmax.f32 %v243, 1e-16
        %v253 = vrsqrt.pop %v244
        %v254 = vmul.f32 %v253, %v244
        %v255 = vmul.f32 %v254, %v253
        %v256 = vmul.f32 0.5, %v255
        %v257 = vsub.f32 1.5, %v256
        %v258 = vmul.f32 %v253, %v257
        %vm259 = vweird.f32 %v244
        %vm260 = vweird.f32 %v253
        %vm261 = vmor %vm259, %vm260
        %v262 = vsel %vm261, %v253, %v258
        %v263 = vrsqrt.pop %v245
        %v264 = vmul.f32 %v263, %v245
        %v265 = vmul.f32 %v264, %v263
        %v266 = vmul.f32 0.5, %v265
        %v267 = vsub.f32 1.5, %v266
        %v268 = vmul.f32 %v263, %v267
        %vm269 = vweird.f32 %v245
        %vm270 = vweird.f32 %v263
        %vm271 = vmor %vm269, %vm270
        %v272 = vsel %vm271, %v263, %v268
        %v273 = vrsqrt.pop %v246
        %v274 = vmul.f32 %v273, %v246
        %v275 = vmul.f32 %v274, %v273
        %v276 = vmul.f32 0.5, %v275
        %v277 = vsub.f32 1.5, %v276
        %v278 = vmul.f32 %v273, %v277
        %vm279 = vweird.f32 %v246
        %vm280 = vweird.f32 %v273
        %vm281 = vmor %vm279, %vm280
        %v282 = vsel %vm281, %v273, %v278
        %v283 = vrsqrt.pop %v247
        %v284 = vmul.f32 %v283, %v247
        %v285 = vmul.f32 %v284, %v283
        %v286 = vmul.f32 0.5, %v285
        %v287 = vsub.f32 1.5, %v286
        %v288 = vmul.f32 %v283, %v287
        %vm289 = vweird.f32 %v247
        %vm290 = vweird.f32 %v283
        %vm291 = vmor %vm289, %vm290
        %v292 = vsel %vm291, %v283, %v288
        %v293 = vrsqrt.pop %v248
        %v294 = vmul.f32 %v293, %v248
        %v295 = vmul.f32 %v294, %v293
        %v296 = vmul.f32 0.5, %v295
        %v297 = vsub.f32 1.5, %v296
        %v298 = vmul.f32 %v293, %v297
        %vm299 = vweird.f32 %v248
        %vm300 = vweird.f32 %v293
        %vm301 = vmor %vm299, %vm300
        %v302 = vsel %vm301, %v293, %v298
        %v303 = vrsqrt.pop %v249
        %v304 = vmul.f32 %v303, %v249
        %v305 = vmul.f32 %v304, %v303
        %v306 = vmul.f32 0.5, %v305
        %v307 = vsub.f32 1.5, %v306
        %v308 = vmul.f32 %v303, %v307
        %vm309 = vweird.f32 %v249
        %vm310 = vweird.f32 %v303
        %vm311 = vmor %vm309, %vm310
        %v312 = vsel %vm311, %v303, %v308
        %v313 = vrsqrt.pop %v250
        %v314 = vmul.f32 %v313, %v250
        %v315 = vmul.f32 %v314, %v313
        %v316 = vmul.f32 0.5, %v315
        %v317 = vsub.f32 1.5, %v316
        %v318 = vmul.f32 %v313, %v317
        %vm319 = vweird.f32 %v250
        %vm320 = vweird.f32 %v313
        %vm321 = vmor %vm319, %vm320
        %v322 = vsel %vm321, %v313, %v318
        %v323 = vrsqrt.pop %v251
        %v324 = vmul.f32 %v323, %v251
        %v325 = vmul.f32 %v324, %v323
        %v326 = vmul.f32 0.5, %v325
        %v327 = vsub.f32 1.5, %v326
        %v328 = vmul.f32 %v323, %v327
        %vm329 = vweird.f32 %v251
        %vm330 = vweird.f32 %v323
        %vm331 = vmor %vm329, %vm330
        %v332 = vsel %vm331, %v323, %v328
        %v333 = vrsqrt.pop %v252
        %v334 = vmul.f32 %v333, %v252
        %v335 = vmul.f32 %v334, %v333
        %v336 = vmul.f32 0.5, %v335
        %v337 = vsub.f32 1.5, %v336
        %v338 = vmul.f32 %v333, %v337
        %vm339 = vweird.f32 %v252
        %vm340 = vweird.f32 %v333
        %vm341 = vmor %vm339, %vm340
        %v342 = vsel %vm341, %v333, %v338
        %v343 = vmul.f32 %v177, %v262
        %v344 = vmul.f32 %v184, %v272
        %v345 = vmul.f32 %v187, %v282
        %v346 = vmul.f32 %v190, %v292
        %v347 = vmul.f32 %v193, %v302
        %v348 = vmul.f32 %v196, %v312
        %v349 = vmul.f32 %v199, %v322
        %v350 = vmul.f32 %v202, %v332
        %v351 = vrot.slane %v345, 4
        %vm352 = vcmask 1047556
        %v353 = vsel %vm352, %v351, %v343
        %v355 = vunpack.c.l.s4 1983009808
        %v356 = vunpack.c.0.s8 %v355
        %v357 = vperm.slane %v353, %v356
        %v358 = vrot.slane %v346, 4
        %v359 = vsel %vm352, %v358, %v344
        %v361 = vunpack.c.l.s4 1983009808
        %v362 = vunpack.c.0.s8 %v361
        %v363 = vperm.slane %v359, %v362
        %v364 = vrot.slane %v349, 4
        %v365 = vsel %vm352, %v364, %v347
        %v367 = vunpack.c.l.s4 1983009808
        %v368 = vunpack.c.0.s8 %v367
        %v369 = vperm.slane %v365, %v368
        %v370 = vrot.slane %v350, 4
        %v371 = vsel %vm352, %v370, %v348
        %v373 = vunpack.c.l.s4 1983009808
        %v374 = vunpack.c.0.s8 %v373
        %v375 = vperm.slane %v371, %v374
        %v376 = vrot.slane %v363, 4
        %v377 = vsel %vm352, %v376, %v357
        %v378 = vrot.slane %v357, 4
        %v379 = vsel %vm352, %v363, %v378
        %v381 = vunpack.c.l.s4 1934713408
        %v382 = vunpack.c.0.s8 %v381
        %v383 = vperm.slane %v377, %v382
        %v385 = vunpack.c.l.s4 1934713408
        %v386 = vunpack.c.0.s8 %v385
        %v387 = vperm.slane %v379, %v386
        %v388 = vrot.slane %v375, 4
        %v389 = vsel %vm352, %v388, %v369
        %v390 = vrot.slane %v369, 4
        %v391 = vsel %vm352, %v375, %v390
        %v393 = vunpack.c.l.s4 1934713408
        %v394 = vunpack.c.0.s8 %v393
        %v395 = vperm.slane %v389, %v394
        %v397 = vunpack.c.l.s4 1934713408
        %v398 = vunpack.c.0.s8 %v397
        %v399 = vperm.slane %v391, %v398
        %v400 = vrot.slane %v395, 4
        %v401 = vsel %vm352, %v400, %v383
        %v402 = vrot.slane %v383, 4
        %v403 = vsel %vm352, %v395, %v402
        %v404 = vrot.slane %v399, 4
        %v405 = vsel %vm352, %v404, %v387
        %v406 = vrot.slane %v387, 4
        %v407 = vsel %vm352, %v399, %v406
        %v408 = vmul.f32 %v205, %v342
        %v410 = vunpack.c.l.s4 1983009808
        %v411 = vunpack.c.0.s8 %v410
        %v412 = vperm.slane %v408, %v411
        %v413 = vrot.slane %v412, 4
        %v414 = vsel %vm352, 0.0, %v413
        %v416 = vunpack.c.l.s4 1934713408
        %v417 = vunpack.c.0.s8 %v416
        %v418 = vperm.slane %v412, %v417
        %v420 = vunpack.c.l.s4 1934713408
        %v421 = vunpack.c.0.s8 %v420
        %v422 = vperm.slane %v414, %v421
        %v423 = vrot.slane %v418, 4
        %v424 = vsel %vm352, 0.0, %v423
        %v425 = vrot.slane %v422, 4
        %v426 = vsel %vm352, 0.0, %v425
        %429 = vrot.lane.b32.xlu0 %v403, 8
        %v430 = vpop.permute.xlu0 %429
        %431 = vrot.lane.b32.xlu0 %v424, 8
        %v432 = vpop.permute.xlu0 %431
        %437 = vrot.lane.b32.xlu0 %v405, 16
        %v438 = vpop.permute.xlu0 %437
        %439 = vrot.lane.b32.xlu0 %v422, 16
        %v440 = vpop.permute.xlu0 %439
        %445 = vrot.lane.b32.xlu0 %v407, 24
        %v446 = vpop.permute.xlu0 %445
        %447 = vrot.lane.b32.xlu0 %v426, 24
        %v448 = vpop.permute.xlu0 %447
        %vm451 = vcmask 64512
        %v452 = vsel %vm451, %v401, %v430
        %v453 = vsel %vm451, %v418, %v432
        %vm454 = vcmask 130048
        %v455 = vsel %vm454, %v452, %v438
        %v456 = vsel %vm454, %v453, %v440
        %vm457 = vcmask 195584
        %v458 = vsel %vm457, %v455, %v446
        %v459 = vsel %vm457, %v456, %v448
        %vm460 = vcmask 261120
        %v462 = vsel %vm460, %v458, 0
        %v465 = vsel %vm460, %v459, 0
        %467 = vmatpush.msra.mxu0 0.0
        %468 = vmatpush.msra.mxu0 0.0
        %469 = vmatpush.msra.mxu0 0.0
        %470 = vmatpush.msra.mxu0 0.0
        %471 = vmatpush.msra.mxu0 0.0
        %472 = vmatpush.msra.mxu0 0.0
        %473 = vmatpush.msra.mxu0 0.0
        %474 = vmatpush.msra.mxu0 0.0
        %475 = vmatpush.msra.mxu0 0.0
        %476 = vmatpush.msra.mxu0 0.0
        %477 = vmatpush.msra.mxu0 0.0
        %478 = vmatpush.msra.mxu0 0.0
        %479 = vmatpush.msra.mxu0 %v181
        %480 = vmatpush.msra.mxu0 %v180
        %481 = vmatpush.msra.mxu0 %v179
        %482 = vmatpush.msra.mxu0 %v178
        %483 = vmatmul.f32.gmra.mxu0 %v462
        %v484 = vpop.f32.mrf.mxu0
        %v485 = vadd.f32 0.0, %v484
        %486 = vmatmul.f32.gmra.mxu0 %v465
        %v487 = vpop.f32.mrf.mxu0
        %v488 = vadd.f32 0.0, %v487
        %489 = vdwg.mxu0
        %v490 = vmax.f32 %v485, 0.0
        %v491 = vmax.f32 %v488, 0.0
        %vm492 = vcmask 1040384
        %v493 = vsel %vm492, %v491, -inf
        %v494 = vmax.f32 %v490, %v493
        %v495 = vrot.slane %v494, 4
        %v496 = vmax.f32 %v494, %v495
        %v497 = vrot.slane %v496, 2
        %v498 = vmax.f32 %v496, %v497
        %v499 = vrot.slane %v498, 1
        %v500 = vmax.f32 %v498, %v499
        %501 = vst [vmem:[%s176] sm:$0x1] %v500
        %s502 = sand.u32 %s75, 1
        %s503 = scalar_lea.sflag [#allocation4], %s502
        %s504 = sand.u32 %s75, 1
        %s505 = scalar_lea.vmem [#allocation7], %s504
        // Predicated region
        $region37: #{tpu_custom_call.1} parent=27 // pred_check
          %p506 = pneg %p85
        $region38: #{tpu_custom_call.1} parent=27 // pred_check_branch
          %508 = sbr.rel (%p506) target = $region40
        $region39: #{tpu_custom_call.1} parent=27 // pred_region
          %510 = vsyncadd %s503, 0
          %s511 = scalar_lea.hbm %s2, %s20
          %s513 = sshll.u32 %s505, 4
          %s514 = int_to_ptr.vmem [resolvable:$true] %s513
          %s515 = sshll.u32 %s511, 4
          %s516 = int_to_ptr.hbm [resolvable:$true] %s515
          %518 = dma.vmem_to_hbm [thread:$0]  %s514, 16, %s516, %s503
        $region40: #{tpu_custom_call.1} parent=27 // pred_fallthru
          _
      $region28: #{tpu_custom_call.1} parent=5 // pred_fallthru
        _
      %p519 = scmp.le.s32.totalorder 2, %s15
      // Predicated region
      $region41: #{tpu_custom_call.1} parent=5 // pred_check
        %p520 = pneg %p519
      $region42: #{tpu_custom_call.1} parent=5 // pred_check_branch
        %522 = sbr.rel (%p520) target = $region44
      $region43: #{tpu_custom_call.1} parent=5 // pred_region
        %s523 = ssub.s32 %s15, 2
        // Predicated region
        $region45: #{tpu_custom_call.1} parent=43 // pred_check
          %p524 = pneg %p91
        $region46: #{tpu_custom_call.1} parent=43 // pred_check_branch
          %526 = sbr.rel (%p524) target = $region48
        $region47: #{tpu_custom_call.1} parent=43 // pred_region
          %s527 = sand.u32 %s76, 1
          %s528 = scalar_lea.sflag [#allocation4], %s527
          %s529 = sand.u32 %s76, 1
          %s530 = scalar_lea.vmem [#allocation7], %s529
          %532 = dma.done %s528, 16
        $region48: #{tpu_custom_call.1} parent=43 // pred_fallthru
          _
      $region44: #{tpu_custom_call.1} parent=5 // pred_fallthru
        _
    $region6: #{tpu_custom_call.1} parent=1 // loop_footer
      %s19 = sadd.s32 1, %s15
    $region7: #{tpu_custom_call.1} parent=1 // loop_footer_branch
      %14 = sbr.rel target = $region3
    $region8: #{tpu_custom_call.1} parent=1 // loop_exit
      _
    %533 = vsyncpa [#allocation3], 1
    %s534 = scalar_lea.sflag [#allocation3], 1
    %535 = vsyncpa %s534, 1
    %536 = vsyncpa [#allocation6], 1
    %537 = vsyncpa [#allocation4], 1
    %s538 = scalar_lea.sflag [#allocation4], 1
    %539 = vsyncpa %s538, 1

</llo_original>
